<compile_context>
chip_gen: v6e
topology: v6e:2x2x1
jax: 0.10.0
libtpu: 0.0.40
codegen_flags: <defaults>
</compile_context>

<pallas_src>
import functools
import math

import jax
import jax.numpy as jnp
from jax import lax
from jax.experimental import pallas as pl
from jax.experimental.pallas import tpu as pltpu

# ----------------------------------------------------------------------------
# Device-aware VMEM budgeting
# ----------------------------------------------------------------------------
_DEFAULT_VMEM_CAP = 64 * 1024 * 1024   # assume the smallest (v7x per-TC) if unknown
_HEADROOM_BYTES = 8 * 1024 * 1024      # compiler-internal scratch / in-kernel temporaries
_MAX_BLOCK_BYTES = 4 * 1024 * 1024     # per-input block target (review: 3-4 MiB)
_PALLAS_MIN_BYTES = 1024 * 1024        # below this, XLA fuses the weighted sum for free
_LANE_CANDIDATES = (8192, 4096, 2048, 1024, 512, 256, 128)


@functools.lru_cache(maxsize=1)
def _vmem_budget_bytes() -> int:
    cap = _DEFAULT_VMEM_CAP
    try:
        info = pltpu.get_tpu_info()
        cap = int(getattr(info, "vmem_capacity_bytes", cap) or cap)
    except Exception:
        pass
    # Leave roughly half of physical VMEM to the pipeline buffers + scratch.
    return max(16 * 1024 * 1024, min(cap // 2, 64 * 1024 * 1024))


def _sublane_tile(itemsize: int) -> int:
    # Native sublane tile: 8 rows (4-byte), 16 (2-byte), 32 (1-byte dtypes).
    return max(8, 32 // max(1, itemsize))


# ----------------------------------------------------------------------------
# Plain-XLA helpers (weight normalisation, small-tensor fallback, reference)
# ----------------------------------------------------------------------------
def _normalize_weights(weights, epsilon):
    w = jnp.maximum(weights.astype(jnp.float32), 0.0)
    return w / (jnp.sum(w) + jnp.float32(epsilon))


def _weighted_sum_xla(inputs, w_norm):
    out = w_norm[0] * inputs[0].astype(jnp.float32)
    for i in range(1, len(inputs)):
        out = out + w_norm[i] * inputs[i].astype(jnp.float32)
    return out.astype(inputs[0].dtype)


def bifpn_fusion_ref(inputs, weights, epsilon: float = 1e-4):
    return _weighted_sum_xla(inputs, _normalize_weights(weights, epsilon))


def upsample_nearest_2x(x):
    return jnp.repeat(jnp.repeat(x, 2, axis=-2), 2, axis=-1)


def maxpool_3x3_s2_p1(x):
    init = jnp.array(-jnp.inf, dtype=x.dtype)
    return lax.reduce_window(
        x, init, lax.max,
        window_dimensions=(1, 1, 3, 3), window_strides=(1, 1, 2, 2),
        padding=((0, 0), (0, 0), (1, 1), (1, 1)))


def resize_if_needed(s, t):
    if s.shape[-2:] != t.shape[-2:]:
        # TODO(synk): bilinear resize (align_corners=False) delegated to jax.image.resize.
        return jax.image.resize(
            s, s.shape[:2] + t.shape[-2:], method="bilinear").astype(s.dtype)
    return s


# ----------------------------------------------------------------------------
# Generic weighted-fusion Pallas kernel (2 or 3 same-shape inputs)
# ----------------------------------------------------------------------------
def _fusion_kernel(w_ref, *refs, num_inputs: int):
    # w_ref : SMEM (num_inputs,) f32 -- already ReLU-normalized weights
    # refs  : num_inputs VMEM input tiles (TB, LANES) + 1 VMEM output tile
    x_refs = refs[:num_inputs]
    o_ref = refs[num_inputs]
    acc = w_ref[0] * x_refs[0][...].astype(jnp.float32)
    for i in range(1, num_inputs):
        acc = acc + w_ref[i] * x_refs[i][...].astype(jnp.float32)
    o_ref[...] = acc.astype(o_ref.dtype)


def bifpn_fusion(inputs, weights, epsilon: float = 1e-4, *,
                 min_pallas_bytes: int = _PALLAS_MIN_BYTES):
    """Weighted fusion of same-shape NCHW tensors (BiFPNFusionNode forward)."""
    num_inputs = len(inputs)
    assert weights.shape == (num_inputs,)
    orig_shape = inputs[0].shape
    dtype = inputs[0].dtype
    itemsize = jnp.dtype(dtype).itemsize
    total = math.prod(orig_shape)

    w = _normalize_weights(weights, epsilon)

    # Pick the widest lane count (multiple of 128) that divides the element count.
    lanes = next((l for l in _LANE_CANDIDATES if total % l == 0), None)

    # Small tensors / awkward element counts: let XLA fuse the 2-3 term weighted
    # sum with its producers/consumers.  This also removes the old whole-tensor
    # pad fallback (2 extra HBM passes) for sizes not divisible by 128.
    if lanes is None or total * itemsize < min_pallas_bytes:
        return _weighted_sum_xla(inputs, w)

    rows = total // lanes
    vmem_budget = _vmem_budget_bytes()
    block_bytes = min(_MAX_BLOCK_BYTES,
                      max(256 * 1024,
                          (vmem_budget - _HEADROOM_BYTES) // (2 * (num_inputs + 1))))
    sub = _sublane_tile(itemsize)
    tb = max(sub, (block_bytes // (lanes * itemsize)) // sub * sub)
    if tb >= rows:
        tb = rows  # full second-to-last dim: always a legal block shape

    grid = (pl.cdiv(rows, tb),)
    block_spec = pl.BlockSpec((tb, lanes), lambda i: (i, 0))
    xs2d = [x.reshape(rows, lanes) for x in inputs]
    kernel = functools.partial(_fusion_kernel, num_inputs=num_inputs)

    out2d = pl.pallas_call(
        kernel,
        out_shape=jax.ShapeDtypeStruct((rows, lanes), dtype),
        grid_spec=pltpu.PrefetchScalarGridSpec(
            num_scalar_prefetch=0,
            grid=grid,
            in_specs=[pl.BlockSpec(memory_space=pltpu.MemorySpace.SMEM)]
            + [block_spec] * num_inputs,
            out_specs=block_spec,
        ),
        compiler_params=pltpu.CompilerParams(
            dimension_semantics=("parallel",),
            vmem_limit_bytes=vmem_budget,
        ),
    )(w, *xs2d)
    return out2d.reshape(orig_shape)


# ----------------------------------------------------------------------------
# Fused top-down node: w0 * fine + w1 * nearest_upsample_2x(coarse)
# The coarse level is read at quarter size; the 2x expansion happens in-kernel
# via exact 0/1 duplication matmuls, so the upsampled tensor never hits HBM.
# ----------------------------------------------------------------------------
def _td_upsample_fusion_kernel(w_ref, x_ref, c_ref, o_ref, *,
                               bnc: int, hc: int, wc: int, num_splits: int):
    h, w = 2 * hc, 2 * wc
    # 0/1 "nearest 2x" duplication matrices (exactly representable in bf16):
    #   ew[k, j] = (j // 2 == k)   -> right-multiply duplicates columns (lanes)
    #   eh[j, k] = (j // 2 == k)   -> left-multiply  duplicates rows (sublanes)
    ew = (lax.broadcasted_iota(jnp.int32, (wc, w), 1) // 2
          == lax.broadcasted_iota(jnp.int32, (wc, w), 0)).astype(jnp.bfloat16)
    eh = (lax.broadcasted_iota(jnp.int32, (h, hc), 0) // 2
          == lax.broadcasted_iota(jnp.int32, (h, hc), 1)).astype(jnp.bfloat16)
    w0 = w_ref[0]
    w1 = w_ref[1]

    @pl.loop(0, bnc)
    def _(b):
        c = c_ref[b].astype(jnp.float32)                  # (hc, wc)
        # Split into bf16-exact pieces so the 0/1 selection matmuls are exact
        # regardless of how the MXU handles f32 operands (MXU is idle otherwise).
        pieces = []
        rem = c
        for s in range(num_splits):
            p = rem.astype(jnp.bfloat16)
            pieces.append(p)
            if s + 1 < num_splits:
                rem = rem - p.astype(jnp.float32)
        up = None
        for p in pieces:
            ce = jnp.dot(p, ew, preferred_element_type=jnp.float32)          # (hc, w)
            term = jnp.dot(eh, ce.astype(jnp.bfloat16),
                           preferred_element_type=jnp.float32)               # (h, w)
            up = term if up is None else up + term
        out = w0 * x_ref[b].astype(jnp.float32) + w1 * up
        o_ref[b] = out.astype(o_ref.dtype)


def bifpn_fusion_topdown(x_fine, x_coarse, weights, epsilon: float = 1e-4, *,
                         min_pallas_bytes: int = _PALLAS_MIN_BYTES):
    """Top-down BiFPN node: fuse(x_fine, upsample2x(x_coarse)) without
    materialising the upsampled tensor in HBM (when the spatial dims allow it)."""
    assert weights.shape == (2,)
    n, ch, hh, ww = x_fine.shape
    nb, cb, hc, wc = x_coarse.shape
    dtype = x_fine.dtype
    itemsize = jnp.dtype(dtype).itemsize
    fine_bytes = n * ch * hh * ww * itemsize
    vmem_budget = _vmem_budget_bytes()

    fits = (n == nb and ch == cb and hh == 2 * hc and ww == 2 * wc
            and x_coarse.dtype == dtype
            and fine_bytes >= min_pallas_bytes)
    bnc = 1
    if fits:
        nc = n * ch
        slice_in_bytes = (hh * ww + hc * wc) * itemsize            # fine + coarse read
        slice_all_bytes = (2 * hh * ww + hc * wc) * itemsize       # + output write
        # rough upper bound on f32 temporaries kept live for one slice + matrices
        temp_bytes = (2 * hh * ww + hc * wc + 2 * hc * ww) * 4 + (wc * ww + hh * hc) * 2
        bnc = max(1, min(nc, _MAX_BLOCK_BYTES // max(1, slice_in_bytes)))
        while bnc > 1 and 2 * bnc * slice_all_bytes + temp_bytes + _HEADROOM_BYTES > vmem_budget:
            bnc //= 2
        if 2 * bnc * slice_all_bytes + temp_bytes + _HEADROOM_BYTES > vmem_budget:
            fits = False

    if not fits:
        # Fallback: materialise the nearest-2x upsample (+ bilinear resize when the
        # spatial dims are not an exact 2x match, as in the PyTorch module) and run
        # the generic fusion kernel / XLA path.
        up = upsample_nearest_2x(x_coarse)
        up = resize_if_needed(up, x_fine)
        return bifpn_fusion([x_fine, up], weights, epsilon,
                            min_pallas_bytes=min_pallas_bytes)

    w = _normalize_weights(weights, epsilon)
    nc = n * ch
    xf = x_fine.reshape(nc, hh, ww)
    xc = x_coarse.reshape(nc, hc, wc)

    dt = jnp.dtype(dtype)
    if dt == jnp.dtype(jnp.bfloat16):
        num_splits = 1      # bf16 inputs are already bf16-exact
    elif dt == jnp.dtype(jnp.float16):
        num_splits = 2
    else:
        num_splits = 3      # f32: 3 bf16 pieces -> result exact to f32 precision

    kernel = functools.partial(_td_upsample_fusion_kernel,
                               bnc=bnc, hc=hc, wc=wc, num_splits=num_splits)
    grid = (pl.cdiv(nc, bnc),)
    fine_spec = pl.BlockSpec((bnc, hh, ww), lambda i: (i, 0, 0))
    coarse_spec = pl.BlockSpec((bnc, hc, wc), lambda i: (i, 0, 0))

    out3d = pl.pallas_call(
        kernel,
        out_shape=jax.ShapeDtypeStruct((nc, hh, ww), dtype),
        grid_spec=pltpu.PrefetchScalarGridSpec(
            num_scalar_prefetch=0,
            grid=grid,
            in_specs=[pl.BlockSpec(memory_space=pltpu.MemorySpace.SMEM),
                      fine_spec, coarse_spec],
            out_specs=fine_spec,
        ),
        compiler_params=pltpu.CompilerParams(
            dimension_semantics=("parallel",),
            vmem_limit_bytes=vmem_budget,
        ),
    )(w, xf, xc)
    return out3d.reshape(n, ch, hh, ww)


def _topdown_ref(x_fine, x_coarse, weights, epsilon: float = 1e-4):
    up = resize_if_needed(upsample_nearest_2x(x_coarse), x_fine)
    return bifpn_fusion_ref([x_fine, up], weights, epsilon)


# ----------------------------------------------------------------------------
# BiFPNLayer plumbing (convs / pooling / resize left to XLA)
# ----------------------------------------------------------------------------
def depthwise_separable_conv(x, p):
    # TODO(synk): depthwise/pointwise convs + BatchNorm2d (eval mode, running stats,
    # eps=1e-3 as in the PyTorch module) + ReLU are delegated to XLA
    # (lax.conv_general_dilated); not a Pallas kernel.
    c = x.shape[1]
    y = lax.conv_general_dilated(
        x, p["dw_kernel"], window_strides=(1, 1), padding=((1, 1), (1, 1)),
        dimension_numbers=("NCHW", "OIHW", "NCHW"), feature_group_count=c)
    y = lax.conv_general_dilated(
        y, p["pw_kernel"], window_strides=(1, 1), padding="VALID",
        dimension_numbers=("NCHW", "OIHW", "NCHW"))
    mean = p["bn_mean"][None, :, None, None]
    var = p["bn_var"][None, :, None, None]
    gamma = p["bn_gamma"][None, :, None, None]
    beta = p["bn_beta"][None, :, None, None]
    y = (y - mean) * lax.rsqrt(var + 1e-3) * gamma + beta
    return jnp.maximum(y, 0.0)


def init_bifpn_layer_params(key, num_channels, num_levels):
    params = {"convs": [], "td_w": [], "bu_w": []}
    keys = jax.random.split(key, 2 * num_levels)
    for i in range(num_levels):
        k1, k2 = keys[2 * i], keys[2 * i + 1]
        params["convs"].append({
            "dw_kernel": 0.1 * jax.random.normal(k1, (num_channels, 1, 3, 3), jnp.float32),
            "pw_kernel": 0.1 * jax.random.normal(k2, (num_channels, num_channels, 1, 1), jnp.float32),
            "bn_gamma": jnp.ones((num_channels,), jnp.float32),
            "bn_beta": jnp.zeros((num_channels,), jnp.float32),
            "bn_mean": jnp.zeros((num_channels,), jnp.float32),
            "bn_var": jnp.ones((num_channels,), jnp.float32),
        })
    for _ in range(num_levels - 1):
        params["td_w"].append(jnp.ones((2,), jnp.float32) + 0.1 * jnp.arange(2, dtype=jnp.float32))
    for i in range(num_levels):
        n = 2 if (i == 0 or i == num_levels - 1) else 3
        params["bu_w"].append(jnp.ones((n,), jnp.float32) + 0.05 * jnp.arange(n, dtype=jnp.float32))
    return params


def bifpn_layer_forward(params, inputs, epsilon: float = 1e-4, use_pallas: bool = True):
    num_levels = len(inputs)
    if use_pallas:
        fusion = bifpn_fusion
        td_fusion = bifpn_fusion_topdown
    else:
        fusion = bifpn_fusion_ref
        td_fusion = _topdown_ref

    # Top-down pathway (upsample is fused into the Pallas node when it is exactly 2x).
    td = [None] * num_levels
    td[-1] = inputs[-1]
    for i in range(num_levels - 2, -1, -1):
        fused = td_fusion(inputs[i], td[i + 1], params["td_w"][i], epsilon)
        td[i] = depthwise_separable_conv(fused, params["convs"][i])

    # Bottom-up pathway.
    out = [None] * num_levels
    out[0] = td[0]
    for i in range(1, num_levels):
        down = maxpool_3x3_s2_p1(out[i - 1])
        down = resize_if_needed(down, inputs[i])
        td_r = resize_if_needed(td[i], inputs[i])
        if i == num_levels - 1:
            fused_in = [inputs[i], down]
        else:
            fused_in = [inputs[i], td_r, down]
        fused = fusion(fused_in, params["bu_w"][i], epsilon)
        out[i] = depthwise_separable_conv(fused, params["convs"][i])
    return out


# ----------------------------------------------------------------------------
# Self-test
# ----------------------------------------------------------------------------
if __name__ == "__main__":
    key = jax.random.PRNGKey(0)
    k_fusion, k_td, k_layer = jax.random.split(key, 3)

    # --- 1) generic weighted-fusion kernel (min_pallas_bytes=0 forces the Pallas path) ---
    cases = [
        ((2, 4, 16, 16), 3, jnp.float32, 1e-5),
        ((2, 4, 16, 16), 2, jnp.float32, 1e-5),
        ((4, 25, 128, 128), 3, jnp.float32, 1e-5),   # multi-block grid + ragged row tail
        ((2, 4, 16, 16), 3, jnp.bfloat16, 1e-2),
    ]
    for shape, n_in, dtype, tol in cases:
        ks = jax.random.split(k_fusion, n_in)
        xs = [jax.random.normal(ks[i], shape, jnp.float32).astype(dtype) for i in range(n_in)]
        wts = jnp.ones((n_in,), jnp.float32) + 0.1 * jnp.arange(n_in, dtype=jnp.float32)
        out = jax.block_until_ready(bifpn_fusion(xs, wts, min_pallas_bytes=0))
        ref = bifpn_fusion_ref(xs, wts)
        assert out.shape == shape and out.dtype == dtype
        assert jnp.allclose(out.astype(jnp.float32), ref.astype(jnp.float32), atol=tol, rtol=tol)

    # --- 2) fused upsample + fusion kernel (top-down node, upsample never hits HBM) ---
    for dtype, tol in ((jnp.float32, 1e-4), (jnp.bfloat16, 1e-2)):
        kf, kc = jax.random.split(k_td)
        fine = jax.random.normal(kf, (2, 32, 64, 128), jnp.float32).astype(dtype)
        coarse = jax.random.normal(kc, (2, 32, 32, 64), jnp.float32).astype(dtype)
        wts = jnp.array([1.0, 1.3], jnp.float32)
        out = jax.block_until_ready(bifpn_fusion_topdown(fine, coarse, wts, min_pallas_bytes=0))
        ref = _topdown_ref(fine, coarse, wts)
        assert out.shape == fine.shape and out.dtype == dtype
        assert jnp.allclose(out.astype(jnp.float32), ref.astype(jnp.float32), atol=tol, rtol=tol)

    # --- 3) full BiFPNLayer forward (level-0 top-down node is big enough to use the
    #        fused Pallas kernel; the small levels take the XLA path via the cutoff) ---
    num_levels, num_channels, N = 3, 32, 2
    spatial = [64, 32, 16]
    kk = jax.random.split(k_layer, num_levels + 1)
    inputs = [
        jax.random.normal(kk[i], (N, num_channels, s, s), jnp.float32)
        for i, s in enumerate(spatial)
    ]
    params = init_bifpn_layer_params(kk[-1], num_channels, num_levels)

    outs = jax.block_until_ready(bifpn_layer_forward(params, inputs, use_pallas=True))
    outs_ref = bifpn_layer_forward(params, inputs, use_pallas=False)
    for o, r, x in zip(outs, outs_ref, inputs):
        assert o.shape == x.shape
        assert jnp.allclose(o, r, atol=1e-4, rtol=1e-4)

    print("KERNEL_OK")
</pallas_src>

<mosaic_0001>
module attributes {stable_mosaic.version = 11 : i64} {
  func.func @_fusion_kernel(%arg0: i32, %arg1: memref<3xf32, #tpu.memory_space<smem>>, %arg2: memref<1x2048xf32, #tpu.memory_space<vmem>>, %arg3: memref<1x2048xf32, #tpu.memory_space<vmem>>, %arg4: memref<1x2048xf32, #tpu.memory_space<vmem>>, %arg5: memref<1x2048xf32, #tpu.memory_space<vmem>>) attributes {dimension_semantics = [#tpu.dimension_semantics<parallel>], iteration_bounds = array<i64: 1>, scalar_prefetch = 0 : i64, scratch_operands = 0 : i64, tpu.core_type = #tpu.core_type<tc>, window_params = [{transform_indices = @transform_0, window_bounds = array<i64: 3>}, {transform_indices = @transform_1, window_bounds = array<i64: 1, 2048>}, {transform_indices = @transform_2, window_bounds = array<i64: 1, 2048>}, {transform_indices = @transform_3, window_bounds = array<i64: 1, 2048>}, {transform_indices = @transform_4, window_bounds = array<i64: 1, 2048>}]} {
    %c0 = arith.constant 0 : index
    %0 = memref.load %arg1[%c0] : memref<3xf32, #tpu.memory_space<smem>>
    %c0_0 = arith.constant 0 : index
    %c0_1 = arith.constant 0 : index
    %1 = vector.load %arg2[%c0_0, %c0_1] : memref<1x2048xf32, #tpu.memory_space<vmem>>, vector<1x2048xf32>
    %2 = vector.broadcast %0 : f32 to vector<1x2048xf32>
    %3 = arith.mulf %2, %1 : vector<1x2048xf32>
    %c1 = arith.constant 1 : index
    %4 = memref.load %arg1[%c1] : memref<3xf32, #tpu.memory_space<smem>>
    %c0_2 = arith.constant 0 : index
    %c0_3 = arith.constant 0 : index
    %5 = vector.load %arg3[%c0_2, %c0_3] : memref<1x2048xf32, #tpu.memory_space<vmem>>, vector<1x2048xf32>
    %6 = vector.broadcast %4 : f32 to vector<1x2048xf32>
    %7 = arith.mulf %6, %5 : vector<1x2048xf32>
    %8 = arith.addf %3, %7 : vector<1x2048xf32>
    %c2 = arith.constant 2 : index
    %9 = memref.load %arg1[%c2] : memref<3xf32, #tpu.memory_space<smem>>
    %c0_4 = arith.constant 0 : index
    %c0_5 = arith.constant 0 : index
    %10 = vector.load %arg4[%c0_4, %c0_5] : memref<1x2048xf32, #tpu.memory_space<vmem>>, vector<1x2048xf32>
    %11 = vector.broadcast %9 : f32 to vector<1x2048xf32>
    %12 = arith.mulf %11, %10 : vector<1x2048xf32>
    %13 = arith.addf %8, %12 : vector<1x2048xf32>
    %c0_6 = arith.constant 0 : index
    %c0_7 = arith.constant 0 : index
    %14 = vector.load %arg5[%c0_6, %c0_7] : memref<1x2048xf32, #tpu.memory_space<vmem>>, vector<1x2048xf32>
    tpu.vector_store %arg5[%c0_6, %c0_7], %13 {strides = array<i32>} : memref<1x2048xf32, #tpu.memory_space<vmem>>, vector<1x2048xf32>,
    return
  }
  func.func @transform_0(%arg0: i32) -> i32 {
    %c0_i32 = arith.constant 0 : i32
    %c0_i32_0 = arith.constant 0 : i32
    return %c0_i32 : i32
  }
  func.func @transform_1(%arg0: i32) -> (i32, i32) {
    %c0_i32 = arith.constant 0 : i32
    %c0_i32_0 = arith.constant 0 : i32
    return %arg0, %c0_i32 : i32, i32
  }
  func.func @transform_2(%arg0: i32) -> (i32, i32) {
    %c0_i32 = arith.constant 0 : i32
    %c0_i32_0 = arith.constant 0 : i32
    return %arg0, %c0_i32 : i32, i32
  }
  func.func @transform_3(%arg0: i32) -> (i32, i32) {
    %c0_i32 = arith.constant 0 : i32
    %c0_i32_0 = arith.constant 0 : i32
    return %arg0, %c0_i32 : i32, i32
  }
  func.func @transform_4(%arg0: i32) -> (i32, i32) {
    %c0_i32 = arith.constant 0 : i32
    %c0_i32_0 = arith.constant 0 : i32
    return %arg0, %c0_i32 : i32, i32
  }
}

</mosaic_0001>

<llo_original>
// kernel: tpu_custom_call.1
$region0: #{tpu_custom_call.1}
  #allocation0 [shape = 'u32[]', space=smem, size = 0x4, offset = 0x4, fixed_abs, tag = 'smem constant byte address 0x4 - core index']
  #allocation1 [shape = 'u32[144,128]{1,0:T(1,128)}', space=vmem, size = 0x12000, scoped, tag = 'internal scratch']
  %s0 = inlined_call_operand.hbm [shape: f32[3], index: 0, kind: input, shape index: {}]
  %s1 = inlined_call_operand.hbm [shape: f32[1,2048], index: 1, kind: input, shape index: {}]
  %s2 = inlined_call_operand.hbm [shape: f32[1,2048], index: 2, kind: input, shape index: {}]
  %s3 = inlined_call_operand.hbm [shape: f32[1,2048], index: 3, kind: input, shape index: {}]
  %s4 = inlined_call_operand.hbm [shape: f32[1,2048], index: 4, kind: output, shape index: {}]
  %s5 = sld [smem:[#allocation0]]
  $region42: #{tpu_custom_call.1} parent=0
    _
  %s7 = ssub.s32 1, %s5
  %s8 = scalar_select 0, %s7, %s5
  $region1: #{tpu_custom_call.1} parent=0
    #allocation2 [shape = 'u8[512]{0}', space=smem, size = 0x200, scoped, tag = 'input window, operand 0, single buffered']
    #allocation3 [shape = 's32[1]{0}', space=sflag, size = 0x4, scoped, tag = 'scoped memory for tpu_custom_call.1']
    #allocation4 [shape = 's32[1]{0}', space=sflag, size = 0x4, scoped, tag = 'scoped memory for tpu_custom_call.1']
    #allocation5 [shape = 's32[1]{0}', space=sflag, size = 0x4, scoped, tag = 'scoped memory for tpu_custom_call.1']
    #allocation6 [shape = 'u8[8192]{0}', space=vmem, size = 0x2000, scoped, tag = 'input window, operand 1, single buffered']
    #allocation7 [shape = 'u8[8192]{0}', space=vmem, size = 0x2000, scoped, tag = 'input window, operand 2, single buffered']
    #allocation8 [shape = 's32[1]{0}', space=sflag, size = 0x4, scoped, tag = 'scoped memory for tpu_custom_call.1']
    #allocation9 [shape = 'u8[8192]{0}', space=vmem, size = 0x2000, scoped, tag = 'input window, operand 3, single buffered']
    #allocation10 [shape = 'u8[8192]{0}', space=vmem, size = 0x2000, scoped, tag = 'output window, operand 0, single buffered']
    %9 = vsyncpa [#allocation5], 0
    %10 = vsyncpa [#allocation3], 0
    %11 = vsyncpa [#allocation8], 0
    %12 = vsyncpa [#allocation4], 0
    // Predicated region
    $region2: #{tpu_custom_call.1} parent=1 // pred_check
      _
    $region3: #{tpu_custom_call.1} parent=1 // pred_check_branch
      %14 = sbr.rel (0) target = $region5
    $region4: #{tpu_custom_call.1} parent=1 // pred_region
      %s16 = ssub.s32 16, 16
      %17 = vsyncadd [#allocation5], %s16
      %20 = dma.hbm_to_smem %s0, 16, [#allocation2], [#allocation5]
    $region5: #{tpu_custom_call.1} parent=1 // pred_fallthru
      _
    // Predicated region
    $region6: #{tpu_custom_call.1} parent=1 // pred_check
      _
    $region7: #{tpu_custom_call.1} parent=1 // pred_check_branch
      %22 = sbr.rel (0) target = $region9
    $region8: #{tpu_custom_call.1} parent=1 // pred_region
      %s24 = ssub.s32 256, 256
      %25 = vsyncadd [#allocation3], %s24
      %s27 = sshll.u32 [#allocation6], 4
      %s28 = int_to_ptr.vmem [resolvable:$true] %s27
      %30 = dma.hbm_to_vmem [thread:$0]  %s1, 256, %s28, [#allocation3]
    $region9: #{tpu_custom_call.1} parent=1 // pred_fallthru
      _
    // Predicated region
    $region10: #{tpu_custom_call.1} parent=1 // pred_check
      _
    $region11: #{tpu_custom_call.1} parent=1 // pred_check_branch
      %32 = sbr.rel (0) target = $region13
    $region12: #{tpu_custom_call.1} parent=1 // pred_region
      %s34 = ssub.s32 256, 256
      %35 = vsyncadd [#allocation8], %s34
      %s37 = sshll.u32 [#allocation7], 4
      %s38 = int_to_ptr.vmem [resolvable:$true] %s37
      %40 = dma.hbm_to_vmem [thread:$0]  %s2, 256, %s38, [#allocation8]
    $region13: #{tpu_custom_call.1} parent=1 // pred_fallthru
      _
    // Predicated region
    $region14: #{tpu_custom_call.1} parent=1 // pred_check
      _
    $region15: #{tpu_custom_call.1} parent=1 // pred_check_branch
      %42 = sbr.rel (0) target = $region17
    $region16: #{tpu_custom_call.1} parent=1 // pred_region
      %s44 = ssub.s32 256, 256
      %45 = vsyncadd [#allocation8], %s44
      %s47 = sshll.u32 [#allocation9], 4
      %s48 = int_to_ptr.vmem [resolvable:$true] %s47
      %50 = dma.hbm_to_vmem [thread:$0]  %s3, 256, %s48, [#allocation8]
    $region17: #{tpu_custom_call.1} parent=1 // pred_fallthru
      _
    // Predicated region
    $region18: #{tpu_custom_call.1} parent=1 // pred_check
      _
    $region19: #{tpu_custom_call.1} parent=1 // pred_check_branch
      %52 = sbr.rel (0) target = $region21
    $region20: #{tpu_custom_call.1} parent=1 // pred_region
      %53 = dma.done [#allocation5], 16
    $region21: #{tpu_custom_call.1} parent=1 // pred_fallthru
      _
    // Predicated region
    $region22: #{tpu_custom_call.1} parent=1 // pred_check
      _
    $region23: #{tpu_custom_call.1} parent=1 // pred_check_branch
      %55 = sbr.rel (0) target = $region25
    $region24: #{tpu_custom_call.1} parent=1 // pred_region
      %56 = dma.done [#allocation3], 256
    $region25: #{tpu_custom_call.1} parent=1 // pred_fallthru
      _
    // Predicated region
    $region26: #{tpu_custom_call.1} parent=1 // pred_check
      _
    $region27: #{tpu_custom_call.1} parent=1 // pred_check_branch
      %58 = sbr.rel (0) target = $region29
    $region28: #{tpu_custom_call.1} parent=1 // pred_region
      %59 = dma.done [#allocation8], 256
    $region29: #{tpu_custom_call.1} parent=1 // pred_fallthru
      _
    // Predicated region
    $region30: #{tpu_custom_call.1} parent=1 // pred_check
      _
    $region31: #{tpu_custom_call.1} parent=1 // pred_check_branch
      %61 = sbr.rel (0) target = $region33
    $region32: #{tpu_custom_call.1} parent=1 // pred_region
      %62 = dma.done [#allocation8], 256
    $region33: #{tpu_custom_call.1} parent=1 // pred_fallthru
      _
    %63 = sfence
    %s64 = sld [smem:[#allocation2]]
    %v65 = vld [vmem:[#allocation6] sm:$0xff]
    %v66 = vld [vmem:[#allocation6 + $0x8] sm:$0xff]
    %v67 = vstv %s64
    %v68 = vmul.f32 %v67, %v65
    %v69 = vmul.f32 %v67, %v66
    %s70 = sld [smem:[#allocation2 + $0x1]]
    %v71 = vld [vmem:[#allocation7] sm:$0xff]
    %v72 = vld [vmem:[#allocation7 + $0x8] sm:$0xff]
    %v73 = vstv %s70
    %v74 = vmul.f32 %v73, %v71
    %v75 = vmul.f32 %v73, %v72
    %v76 = vadd.f32 %v68, %v74
    %v77 = vadd.f32 %v69, %v75
    %s78 = sld [smem:[#allocation2 + $0x2]]
    %v79 = vld [vmem:[#allocation9] sm:$0xff]
    %v80 = vld [vmem:[#allocation9 + $0x8] sm:$0xff]
    %v81 = vstv %s78
    %v82 = vmul.f32 %v81, %v79
    %v83 = vmul.f32 %v81, %v80
    %v84 = vadd.f32 %v76, %v82
    %v85 = vadd.f32 %v77, %v83
    %86 = vst [vmem:[#allocation10] sm:$0xff] %v84
    %87 = vst [vmem:[#allocation10 + $0x8] sm:$0xff] %v85
    // Predicated region
    $region34: #{tpu_custom_call.1} parent=1 // pred_check
      _
    $region35: #{tpu_custom_call.1} parent=1 // pred_check_branch
      %89 = sbr.rel (0) target = $region37
    $region36: #{tpu_custom_call.1} parent=1 // pred_region
      %s91 = ssub.s32 256, 256
      %92 = vsyncadd [#allocation4], %s91
      %s94 = sshll.u32 [#allocation10], 4
      %s95 = int_to_ptr.vmem [resolvable:$true] %s94
      %97 = dma.vmem_to_hbm [thread:$0]  %s95, 256, %s4, [#allocation4]
    $region37: #{tpu_custom_call.1} parent=1 // pred_fallthru
      _
    // Predicated region
    $region38: #{tpu_custom_call.1} parent=1 // pred_check
      _
    $region39: #{tpu_custom_call.1} parent=1 // pred_check_branch
      %99 = sbr.rel (0) target = $region41
    $region40: #{tpu_custom_call.1} parent=1 // pred_region
      %100 = dma.done [#allocation4], 256
    $region41: #{tpu_custom_call.1} parent=1 // pred_fallthru
      _
    %101 = vsyncpa [#allocation3], 1
    %102 = vsyncpa [#allocation8], 1
    %103 = vsyncpa [#allocation4], 1
    %104 = vsyncpa [#allocation5], 1

</llo_original>
